<compile_context>
chip_gen: v6e
topology: v6e:2x2x1
jax: 0.10.0
libtpu: 0.0.40
codegen_flags: <defaults>
</compile_context>

<pallas_src>
import math
import jax
import jax.numpy as jnp
from jax.experimental import pallas as pl
from jax.experimental.pallas import tpu as pltpu


def _round_up(x, m):
    return ((x + m - 1) // m) * m


# ---------------------------------------------------------------------------
# Kernels
# ---------------------------------------------------------------------------
def _linear_kernel_f32out(x_ref, w_ref, b_ref, o_ref):
    # x_ref : (tm, tk)  input tile (compute dtype)
    # w_ref : (tk, tn)  pre-transposed weight tile -> contract dim 0, no relayout
    # b_ref : (1,  tn)  bias row
    # o_ref : (tm, tn)  float32 output tile, resident across the K axis (acts as acc)
    k = pl.program_id(2)

    @pl.when(k == 0)
    def _():
        o_ref[...] = jnp.zeros_like(o_ref)

    o_ref[...] += jnp.dot(x_ref[...], w_ref[...], preferred_element_type=jnp.float32)

    @pl.when(k == pl.num_programs(2) - 1)
    def _():
        o_ref[...] += b_ref[...].astype(jnp.float32)


def _linear_kernel_acc(x_ref, w_ref, b_ref, o_ref, acc_ref):
    # Same as above, but the output dtype is narrower than f32, so accumulate in
    # a dedicated f32 VMEM scratch and cast once on the last K step.
    k = pl.program_id(2)

    @pl.when(k == 0)
    def _():
        acc_ref[...] = jnp.zeros_like(acc_ref)

    acc_ref[...] += jnp.dot(x_ref[...], w_ref[...], preferred_element_type=jnp.float32)

    @pl.when(k == pl.num_programs(2) - 1)
    def _():
        o_ref[...] = (acc_ref[...] + b_ref[...].astype(jnp.float32)).astype(o_ref.dtype)


# ---------------------------------------------------------------------------
# Parameter preparation (hoisted out of the per-call hot path)
# ---------------------------------------------------------------------------
def prepare_linear_params(weight, bias=None, *, tn=1024, tk=512, compute_dtype=None):
    """Transpose + pad (and optionally cast) the PyTorch-layout weight ONCE.

    weight : (out_features, in_features)  -- PyTorch convention at the API boundary
    bias   : (out_features,) or None
    Returns a dict consumed by xavier_linear_prepared().
    """
    N, K = weight.shape
    tn_eff = min(tn, _round_up(N, 128))   # lane-dense output tile
    tk_eff = min(tk, _round_up(K, 128))   # lane-aligned contraction tile
    N_pad = _round_up(N, tn_eff)
    K_pad = _round_up(K, tk_eff)

    w_t = weight.T                        # (K, N): contract dim 0 inside the kernel
    if compute_dtype is not None:
        w_t = w_t.astype(compute_dtype)
    if (K_pad != K) or (N_pad != N):
        w_t = jnp.pad(w_t, ((0, K_pad - K), (0, N_pad - N)))

    b = bias if bias is not None else jnp.zeros((N,), dtype=weight.dtype)
    if N_pad != N:
        b = jnp.pad(b, (0, N_pad - N))
    b = b.reshape(1, N_pad)

    return dict(w=w_t, b=b, out_features=N, in_features=K,
                tn=tn_eff, tk=tk_eff, compute_dtype=compute_dtype)


# ---------------------------------------------------------------------------
# Forward
# ---------------------------------------------------------------------------
def xavier_linear_prepared(x, prepared, *, tm=512):
    """y = x @ weight.T + bias using pre-transposed / pre-padded parameters."""
    w_p = prepared["w"]                   # (K_pad, N_pad)
    b_p = prepared["b"]                   # (1, N_pad)
    N = prepared["out_features"]
    K = prepared["in_features"]
    tn_eff = prepared["tn"]
    tk_eff = prepared["tk"]
    compute_dtype = prepared["compute_dtype"]

    orig_shape = x.shape
    assert orig_shape[-1] == K, f"in_features mismatch: {orig_shape[-1]} vs {K}"
    x2d = x.reshape(-1, K)
    M = x2d.shape[0]
    out_dtype = x.dtype

    K_pad, N_pad = w_p.shape

    tm_eff = min(tm, _round_up(M, 8))     # sublane-aligned M tile
    M_pad = _round_up(M, tm_eff)
    m_tiles = M_pad // tm_eff

    # v7x megacore: make sure the product of the parallel axes is >= 2 when possible.
    tn_use = tn_eff
    if m_tiles == 1 and (N_pad // tn_eff) == 1 and tn_eff % 256 == 0:
        tn_use = tn_eff // 2
    n_tiles = N_pad // tn_use
    k_tiles = K_pad // tk_eff

    # Activation pad (only when needed); cast to the opt-in compute dtype.
    x_p = x2d
    if compute_dtype is not None and x_p.dtype != compute_dtype:
        x_p = x_p.astype(compute_dtype)
    if (M_pad != M) or (K_pad != K):
        x_p = jnp.pad(x_p, ((0, M_pad - M), (0, K_pad - K)))

    cdt_size = x_p.dtype.itemsize
    out_size = jnp.dtype(out_dtype).itemsize
    use_scratch = (out_dtype != jnp.float32)

    # VMEM budget: double-buffered x / w / bias / out (+ optional f32 acc scratch).
    vmem_needed = (2 * tm_eff * tk_eff * cdt_size
                   + 2 * tk_eff * tn_use * cdt_size
                   + 2 * 8 * tn_use * b_p.dtype.itemsize
                   + 2 * tm_eff * tn_use * out_size)
    if use_scratch:
        vmem_needed += tm_eff * tn_use * 4
    # Keep well inside v7x's 64 MiB per-TC VMEM while lifting v5e's 16 MiB default.
    vmem_limit = int(min(max(vmem_needed + (4 << 20), 32 << 20), 56 << 20))

    cost = pl.CostEstimate(
        flops=2 * M_pad * K_pad * N_pad,
        transcendentals=0,
        bytes_accessed=(x_p.size * cdt_size + w_p.size * w_p.dtype.itemsize
                        + b_p.size * b_p.dtype.itemsize + M_pad * N_pad * out_size),
    )

    kernel = _linear_kernel_acc if use_scratch else _linear_kernel_f32out
    scratch = [pltpu.VMEM((tm_eff, tn_use), jnp.float32)] if use_scratch else []

    y_pad = pl.pallas_call(
        kernel,
        out_shape=jax.ShapeDtypeStruct((M_pad, N_pad), out_dtype),
        grid_spec=pltpu.PrefetchScalarGridSpec(
            num_scalar_prefetch=0,
            grid=(m_tiles, n_tiles, k_tiles),        # K innermost (reduction)
            in_specs=[
                pl.BlockSpec((tm_eff, tk_eff), lambda i, j, k: (i, k)),  # x tile
                pl.BlockSpec((tk_eff, tn_use), lambda i, j, k: (k, j)),  # w tile (K,N)
                pl.BlockSpec((1, tn_use), lambda i, j, k: (0, j)),       # bias tile
            ],
            out_specs=pl.BlockSpec((tm_eff, tn_use), lambda i, j, k: (i, j)),
            scratch_shapes=scratch,
        ),
        compiler_params=pltpu.CompilerParams(
            dimension_semantics=("parallel", "parallel", "arbitrary"),
            vmem_limit_bytes=vmem_limit,
        ),
        cost_estimate=cost,
    )(x_p, w_p, b_p)

    y = y_pad
    if (M_pad != M) or (N_pad != N):
        y = y_pad[:M, :N]
    return y.reshape(*orig_shape[:-1], N)


def xavier_linear(x, weight, bias=None, *, tm=512, tn=1024, tk=512, compute_dtype=None):
    """Convenience one-shot path (re-prepares weights each call).

    For repeated forwards, call prepare_linear_params() once and use
    xavier_linear_prepared() so the weight transpose/pad/cast is hoisted.
    """
    prepared = prepare_linear_params(weight, bias, tn=tn, tk=tk,
                                     compute_dtype=compute_dtype)
    return xavier_linear_prepared(x, prepared, tm=tm)


# ---------------------------------------------------------------------------
# Init matching XavierLinear.__init__
# ---------------------------------------------------------------------------
def init_xavier_linear_params(key, in_features, out_features, dtype=jnp.float32):
    """weight ~ xavier_normal_ (gain=1); bias ~ nn.Linear default U(-1/sqrt(in), 1/sqrt(in))."""
    k_w, k_b = jax.random.split(key)
    std = math.sqrt(2.0 / (in_features + out_features))
    weight = std * jax.random.normal(k_w, (out_features, in_features), dtype=dtype)
    bound = 1.0 / math.sqrt(in_features)
    bias = jax.random.uniform(k_b, (out_features,), dtype=dtype,
                              minval=-bound, maxval=bound)
    return weight, bias


if __name__ == "__main__":
    key = jax.random.PRNGKey(0)
    k_x, k_p, k_x2, k_p2 = jax.random.split(key, 4)

    # --- Small shape (single grid step) -----------------------------------
    batch, in_features, out_features = 8, 32, 16
    x = jax.random.normal(k_x, (batch, in_features), dtype=jnp.float32)
    weight, bias = init_xavier_linear_params(k_p, in_features, out_features)

    y = jax.block_until_ready(xavier_linear(x, weight, bias))
    y_ref = x @ weight.T + bias
    assert y.shape == (batch, out_features)
    assert jnp.allclose(y, y_ref, atol=1e-5, rtol=1e-5), "mismatch vs reference (small)"

    # --- Larger shape, hoisted params, multi-step grid (parallel + K axes) --
    x_big = jax.random.normal(k_x2, (512, 1024), dtype=jnp.float32)
    w_big, b_big = init_xavier_linear_params(k_p2, 1024, 768)

    prepared = prepare_linear_params(w_big, b_big)         # pad+transpose once
    y_big = jax.block_until_ready(xavier_linear_prepared(x_big, prepared))
    y_big_ref = x_big @ w_big.T + b_big
    assert jnp.allclose(y_big, y_big_ref, atol=2e-4, rtol=2e-4), "mismatch (tiled path)"

    # --- Opt-in bf16 compute path (f32 accumulation, looser tolerance) -----
    prepared_bf16 = prepare_linear_params(w_big, b_big, compute_dtype=jnp.bfloat16)
    y_bf16 = jax.block_until_ready(xavier_linear_prepared(x_big, prepared_bf16))
    assert jnp.allclose(y_bf16, y_big_ref, atol=3e-2, rtol=3e-2), "mismatch (bf16 path)"

    print("KERNEL_OK")
</pallas_src>

<mosaic_0001>
module attributes {stable_mosaic.version = 11 : i64} {
  func.func @_linear_kernel_f32out(%arg0: i32, %arg1: i32, %arg2: i32, %arg3: memref<8x128xf32, #tpu.memory_space<vmem>>, %arg4: memref<128x128xf32, #tpu.memory_space<vmem>>, %arg5: memref<1x128xf32, #tpu.memory_space<vmem>>, %arg6: memref<8x128xf32, #tpu.memory_space<vmem>>) attributes {dimension_semantics = [#tpu.dimension_semantics<parallel>, #tpu.dimension_semantics<parallel>, #tpu.dimension_semantics<arbitrary>], iteration_bounds = array<i64: 1, 1, 1>, scalar_prefetch = 0 : i64, scratch_operands = 0 : i64, tpu.core_type = #tpu.core_type<tc>, window_params = [{transform_indices = @transform_0, window_bounds = array<i64: 8, 128>}, {transform_indices = @transform_1, window_bounds = array<i64: 128, 128>}, {transform_indices = @transform_2, window_bounds = array<i64: 1, 128>}, {transform_indices = @transform_3, window_bounds = array<i64: 8, 128>}]} {
    %c0_i32 = arith.constant 0 : i32
    %0 = arith.cmpi eq, %arg2, %c0_i32 : i32
    %1 = arith.extui %0 : i1 to i32
    %c0_i32_0 = arith.constant 0 : i32
    %2 = arith.cmpi ne, %1, %c0_i32_0 : i32
    scf.if %2 {
      %cst_10 = arith.constant 0.000000e+00 : f32
      %12 = vector.broadcast %cst_10 : f32 to vector<8x128xf32>
      %c0_11 = arith.constant 0 : index
      %c0_12 = arith.constant 0 : index
      %13 = vector.load %arg6[%c0_11, %c0_12] : memref<8x128xf32, #tpu.memory_space<vmem>>, vector<8x128xf32>
      tpu.vector_store %arg6[%c0_11, %c0_12], %12 {strides = array<i32>} : memref<8x128xf32, #tpu.memory_space<vmem>>, vector<8x128xf32>,
    } else {
    }
    %c0 = arith.constant 0 : index
    %c0_1 = arith.constant 0 : index
    %3 = vector.load %arg6[%c0, %c0_1] : memref<8x128xf32, #tpu.memory_space<vmem>>, vector<8x128xf32>
    %c0_2 = arith.constant 0 : index
    %c0_3 = arith.constant 0 : index
    %4 = vector.load %arg3[%c0_2, %c0_3] : memref<8x128xf32, #tpu.memory_space<vmem>>, vector<8x128xf32>
    %c0_4 = arith.constant 0 : index
    %c0_5 = arith.constant 0 : index
    %5 = vector.load %arg4[%c0_4, %c0_5] : memref<128x128xf32, #tpu.memory_space<vmem>>, vector<128x128xf32>
    %cst = arith.constant dense<0.000000e+00> : vector<8x128xf32>
    %6 = tpu.matmul %4, %5, %cst {dimension_numbers = #tpu.dot_dimension_numbers<[1], [0], [0], [1], [0, 0, 1, 1], [], []>} : vector<8x128xf32>, vector<128x128xf32>, vector<8x128xf32> -> vector<8x128xf32>
    %7 = arith.addf %3, %6 : vector<8x128xf32>
    %c0_6 = arith.constant 0 : index
    %c0_7 = arith.constant 0 : index
    %8 = vector.load %arg6[%c0_6, %c0_7] : memref<8x128xf32, #tpu.memory_space<vmem>>, vector<8x128xf32>
    tpu.vector_store %arg6[%c0_6, %c0_7], %7 {strides = array<i32>} : memref<8x128xf32, #tpu.memory_space<vmem>>, vector<8x128xf32>,
    %c0_i32_8 = arith.constant 0 : i32
    %9 = arith.cmpi eq, %arg2, %c0_i32_8 : i32
    %10 = arith.extui %9 : i1 to i32
    %c0_i32_9 = arith.constant 0 : i32
    %11 = arith.cmpi ne, %10, %c0_i32_9 : i32
    scf.if %11 {
      %c0_10 = arith.constant 0 : index
      %c0_11 = arith.constant 0 : index
      %12 = vector.load %arg6[%c0_10, %c0_11] : memref<8x128xf32, #tpu.memory_space<vmem>>, vector<8x128xf32>
      %c0_12 = arith.constant 0 : index
      %c0_13 = arith.constant 0 : index
      %13 = vector.load %arg5[%c0_12, %c0_13] : memref<1x128xf32, #tpu.memory_space<vmem>>, vector<1x128xf32>
      %14 = vector.broadcast %13 : vector<1x128xf32> to vector<8x128xf32>
      %15 = arith.addf %12, %14 : vector<8x128xf32>
      %c0_14 = arith.constant 0 : index
      %c0_15 = arith.constant 0 : index
      %16 = vector.load %arg6[%c0_14, %c0_15] : memref<8x128xf32, #tpu.memory_space<vmem>>, vector<8x128xf32>
      tpu.vector_store %arg6[%c0_14, %c0_15], %15 {strides = array<i32>} : memref<8x128xf32, #tpu.memory_space<vmem>>, vector<8x128xf32>,
    } else {
    }
    return
  }
  func.func @transform_0(%arg0: i32, %arg1: i32, %arg2: i32) -> (i32, i32) {
    %c0_i32 = arith.constant 0 : i32
    return %arg0, %arg2 : i32, i32
  }
  func.func @transform_1(%arg0: i32, %arg1: i32, %arg2: i32) -> (i32, i32) {
    %c0_i32 = arith.constant 0 : i32
    return %arg2, %arg1 : i32, i32
  }
  func.func @transform_2(%arg0: i32, %arg1: i32, %arg2: i32) -> (i32, i32) {
    %c0_i32 = arith.constant 0 : i32
    %c0_i32_0 = arith.constant 0 : i32
    return %c0_i32, %arg1 : i32, i32
  }
  func.func @transform_3(%arg0: i32, %arg1: i32, %arg2: i32) -> (i32, i32) {
    %c0_i32 = arith.constant 0 : i32
    return %arg0, %arg1 : i32, i32
  }
}

</mosaic_0001>

<llo_original>
// kernel: tpu_custom_call.1
$region0: #{tpu_custom_call.1}
  #allocation0 [shape = 'u32[]', space=smem, size = 0x4, offset = 0x4, fixed_abs, tag = 'smem constant byte address 0x4 - core index']
  #allocation1 [shape = 'u32[144,128]{1,0:T(1,128)}', space=vmem, size = 0x12000, scoped, tag = 'internal scratch']
  %s0 = inlined_call_operand.hbm [shape: f32[8,128], index: 0, kind: input, shape index: {}]
  %s1 = inlined_call_operand.hbm [shape: f32[128,128], index: 1, kind: input, shape index: {}]
  %s2 = inlined_call_operand.vmem [shape: f32[1,128], index: 2, kind: input, shape index: {}]
  %s3 = inlined_call_operand.hbm [shape: f32[8,128], index: 3, kind: output, shape index: {}]
  %s4 = sld [smem:[#allocation0]]
  $region38: #{tpu_custom_call.1} parent=0
    _
  %s6 = ssub.s32 1, %s4
  %s7 = scalar_select 0, %s6, %s4
  $region1: #{tpu_custom_call.1} parent=0
    #allocation2 [shape = 'u8[4096]{0}', space=vmem, size = 0x1000, scoped, tag = 'input window, operand 0, single buffered']
    #allocation3 [shape = 's32[1]{0}', space=sflag, size = 0x4, scoped, tag = 'scoped memory for tpu_custom_call.1']
    #allocation4 [shape = 's32[1]{0}', space=sflag, size = 0x4, scoped, tag = 'scoped memory for tpu_custom_call.1']
    #allocation5 [shape = 'u8[65536]{0}', space=vmem, size = 0x10000, scoped, tag = 'input window, operand 1, single buffered']
    #allocation6 [shape = 's32[1]{0}', space=sflag, size = 0x4, scoped, tag = 'scoped memory for tpu_custom_call.1']
    #allocation7 [shape = 'u8[4096]{0}', space=vmem, size = 0x1000, scoped, tag = 'output window, operand 0, single buffered']
    %8 = vsyncpa [#allocation3], 0
    %9 = vsyncpa [#allocation6], 0
    %10 = vsyncpa [#allocation4], 0
    // Predicated region
    $region2: #{tpu_custom_call.1} parent=1 // pred_check
      _
    $region3: #{tpu_custom_call.1} parent=1 // pred_check_branch
      %12 = sbr.rel (0) target = $region5
    $region4: #{tpu_custom_call.1} parent=1 // pred_region
      %s14 = ssub.s32 128, 128
      %15 = vsyncadd [#allocation3], %s14
      %s17 = sshll.u32 [#allocation2], 4
      %s18 = int_to_ptr.vmem [resolvable:$true] %s17
      %20 = dma.hbm_to_vmem [thread:$0]  %s0, 128, %s18, [#allocation3]
    $region5: #{tpu_custom_call.1} parent=1 // pred_fallthru
      _
    // Predicated region
    $region6: #{tpu_custom_call.1} parent=1 // pred_check
      _
    $region7: #{tpu_custom_call.1} parent=1 // pred_check_branch
      %22 = sbr.rel (0) target = $region9
    $region8: #{tpu_custom_call.1} parent=1 // pred_region
      %s24 = ssub.s32 2048, 2048
      %25 = vsyncadd [#allocation6], %s24
      %s26 = sshll.u32 [#allocation5], 4
      %s27 = int_to_ptr.vmem [resolvable:$true] %s26
      %32 = dma.hbm_to_vmem [thread:$0]  %s1, 2048, %s27, [#allocation6], 128, 128, 8
    $region9: #{tpu_custom_call.1} parent=1 // pred_fallthru
      _
    // Predicated region
    $region10: #{tpu_custom_call.1} parent=1 // pred_check
      _
    $region11: #{tpu_custom_call.1} parent=1 // pred_check_branch
      %34 = sbr.rel (0) target = $region13
    $region12: #{tpu_custom_call.1} parent=1 // pred_region
      _
    $region13: #{tpu_custom_call.1} parent=1 // pred_fallthru
      _
    // Predicated region
    $region14: #{tpu_custom_call.1} parent=1 // pred_check
      _
    $region15: #{tpu_custom_call.1} parent=1 // pred_check_branch
      %36 = sbr.rel (0) target = $region17
    $region16: #{tpu_custom_call.1} parent=1 // pred_region
      %37 = dma.done [#allocation3], 128
    $region17: #{tpu_custom_call.1} parent=1 // pred_fallthru
      _
    // Predicated region
    $region18: #{tpu_custom_call.1} parent=1 // pred_check
      _
    $region19: #{tpu_custom_call.1} parent=1 // pred_check_branch
      %39 = sbr.rel (0) target = $region21
    $region20: #{tpu_custom_call.1} parent=1 // pred_region
      %40 = dma.done [#allocation6], 2048
    $region21: #{tpu_custom_call.1} parent=1 // pred_fallthru
      _
    %p41 = scmp.eq.s32.totalorder 0, 0
    // Predicated region
    $region22: #{tpu_custom_call.1} parent=1 // pred_check
      %p42 = pneg %p41
    $region23: #{tpu_custom_call.1} parent=1 // pred_check_branch
      %44 = sbr.rel (%p42) target = $region25
    $region24: #{tpu_custom_call.1} parent=1 // pred_region
      %45 = vst [vmem:[#allocation7] sm:$0xff] 0.0
    $region25: #{tpu_custom_call.1} parent=1 // pred_fallthru
      _
    %v46 = vld [vmem:[#allocation7] sm:$0xff]
    %v47 = vld [vmem:[#allocation2] sm:$0xff]
    %v48 = vld [vmem:[#allocation5] sm:$0xff]
    %v49 = vld [vmem:[#allocation5 + $0x8] sm:$0xff]
    %v50 = vld [vmem:[#allocation5 + $0x10] sm:$0xff]
    %v51 = vld [vmem:[#allocation5 + $0x18] sm:$0xff]
    %v52 = vld [vmem:[#allocation5 + $0x20] sm:$0xff]
    %v53 = vld [vmem:[#allocation5 + $0x28] sm:$0xff]
    %v54 = vld [vmem:[#allocation5 + $0x30] sm:$0xff]
    %v55 = vld [vmem:[#allocation5 + $0x38] sm:$0xff]
    %v56 = vld [vmem:[#allocation5 + $0x40] sm:$0xff]
    %v57 = vld [vmem:[#allocation5 + $0x48] sm:$0xff]
    %v58 = vld [vmem:[#allocation5 + $0x50] sm:$0xff]
    %v59 = vld [vmem:[#allocation5 + $0x58] sm:$0xff]
    %v60 = vld [vmem:[#allocation5 + $0x60] sm:$0xff]
    %v61 = vld [vmem:[#allocation5 + $0x68] sm:$0xff]
    %v62 = vld [vmem:[#allocation5 + $0x70] sm:$0xff]
    %v63 = vld [vmem:[#allocation5 + $0x78] sm:$0xff]
    %64 = vmatprep.subr.mxu0 0.0
    %65 = vmatpush1.msra.mxu0 %v63
    %66 = vmatprep.subr.mxu0 0.0
    %67 = vmatpush1.msra.mxu0 %v62
    %68 = vmatprep.subr.mxu0 0.0
    %69 = vmatpush1.msra.mxu0 %v61
    %70 = vmatprep.subr.mxu0 0.0
    %71 = vmatpush1.msra.mxu0 %v60
    %72 = vmatprep.subr.mxu0 0.0
    %73 = vmatpush1.msra.mxu0 %v59
    %74 = vmatprep.subr.mxu0 0.0
    %75 = vmatpush1.msra.mxu0 %v58
    %76 = vmatprep.subr.mxu0 0.0
    %77 = vmatpush1.msra.mxu0 %v57
    %78 = vmatprep.subr.mxu0 0.0
    %79 = vmatpush1.msra.mxu0 %v56
    %80 = vmatprep.subr.mxu0 0.0
    %81 = vmatpush1.msra.mxu0 %v55
    %82 = vmatprep.subr.mxu0 0.0
    %83 = vmatpush1.msra.mxu0 %v54
    %84 = vmatprep.subr.mxu0 0.0
    %85 = vmatpush1.msra.mxu0 %v53
    %86 = vmatprep.subr.mxu0 0.0
    %87 = vmatpush1.msra.mxu0 %v52
    %88 = vmatprep.subr.mxu0 0.0
    %89 = vmatpush1.msra.mxu0 %v51
    %90 = vmatprep.subr.mxu0 0.0
    %91 = vmatpush1.msra.mxu0 %v50
    %92 = vmatprep.subr.mxu0 0.0
    %93 = vmatpush1.msra.mxu0 %v49
    %94 = vmatprep.subr.mxu0 0.0
    %95 = vmatpush1.msra.mxu0 %v48
    %96 = vmatprep.subr.mxu0 0.0
    %97 = vmatpush2.msra.mxu0 0.0
    %98 = vmatprep.subr.mxu0 0.0
    %99 = vmatpush2.msra.mxu0 0.0
    %100 = vmatprep.subr.mxu0 0.0
    %101 = vmatpush2.msra.mxu0 0.0
    %102 = vmatprep.subr.mxu0 0.0
    %103 = vmatpush2.msra.mxu0 0.0
    %104 = vmatprep.subr.mxu0 0.0
    %105 = vmatpush2.msra.mxu0 0.0
    %106 = vmatprep.subr.mxu0 0.0
    %107 = vmatpush2.msra.mxu0 0.0
    %108 = vmatprep.subr.mxu0 0.0
    %109 = vmatpush2.msra.mxu0 0.0
    %110 = vmatprep.subr.mxu0 0.0
    %111 = vmatpush2.msra.mxu0 0.0
    %112 = vmatprep.subr.mxu0 0.0
    %113 = vmatpush2.msra.mxu0 0.0
    %114 = vmatprep.subr.mxu0 0.0
    %115 = vmatpush2.msra.mxu0 0.0
    %116 = vmatprep.subr.mxu0 0.0
    %117 = vmatpush2.msra.mxu0 0.0
    %118 = vmatprep.subr.mxu0 0.0
    %119 = vmatpush2.msra.mxu0 0.0
    %120 = vmatprep.subr.mxu0 0.0
    %121 = vmatpush2.msra.mxu0 0.0
    %122 = vmatprep.subr.mxu0 0.0
    %123 = vmatpush2.msra.mxu0 0.0
    %124 = vmatprep.subr.mxu0 0.0
    %125 = vmatpush2.msra.mxu0 0.0
    %126 = vmatprep.subr.mxu0 0.0
    %127 = vmatpush2.msra.mxu0 0.0
    %128 = vmatprep.mubr.f32.mxu0 0.0
    %129 = vmatmul.mubr.f32.gmra.mxu0 %v47
    %v130 = vpop.f32.mrf.mxu0
    %v131 = vadd.f32 0.0, %v130
    %v132 = vpop.f32.mrf.mxu0
    %133 = vdwg.mxu0
    %v134 = vadd.f32 %v46, %v131
    %135 = vst [vmem:[#allocation7] sm:$0xff] %v134
    // Predicated region
    $region26: #{tpu_custom_call.1} parent=1 // pred_check
      %p136 = pneg %p41
    $region27: #{tpu_custom_call.1} parent=1 // pred_check_branch
      %138 = sbr.rel (%p136) target = $region29
    $region28: #{tpu_custom_call.1} parent=1 // pred_region
      %v139 = vld [vmem:[#allocation7] sm:$0xff]
      %v140 = vld [vmem:[%s2] sm:$0x1]
      %v142 = vlaneseq
      %v143 = vshrl.u32 %v142, 7
      %v144 = vsub.s32 0, %v143
      %v145 = vrot.slane %v140, %v144
      %v147 = vadd.f32 %v139, %v145
      %148 = vst [vmem:[#allocation7] sm:$0xff] %v147
    $region29: #{tpu_custom_call.1} parent=1 // pred_fallthru
      _
    // Predicated region
    $region30: #{tpu_custom_call.1} parent=1 // pred_check
      _
    $region31: #{tpu_custom_call.1} parent=1 // pred_check_branch
      %150 = sbr.rel (0) target = $region33
    $region32: #{tpu_custom_call.1} parent=1 // pred_region
      %s152 = ssub.s32 128, 128
      %153 = vsyncadd [#allocation4], %s152
      %s155 = sshll.u32 [#allocation7], 4
      %s156 = int_to_ptr.vmem [resolvable:$true] %s155
      %158 = dma.vmem_to_hbm [thread:$0]  %s156, 128, %s3, [#allocation4]
    $region33: #{tpu_custom_call.1} parent=1 // pred_fallthru
      _
    // Predicated region
    $region34: #{tpu_custom_call.1} parent=1 // pred_check
      _
    $region35: #{tpu_custom_call.1} parent=1 // pred_check_branch
      %160 = sbr.rel (0) target = $region37
    $region36: #{tpu_custom_call.1} parent=1 // pred_region
      %161 = dma.done [#allocation4], 128
    $region37: #{tpu_custom_call.1} parent=1 // pred_fallthru
      _
    %162 = vsyncpa [#allocation3], 1
    %163 = vsyncpa [#allocation6], 1
    %164 = vsyncpa [#allocation4], 1

</llo_original>
